<compile_context>
chip_gen: v5e
topology: v5e:2x2
jax: 0.10.0
libtpu: 0.0.40
codegen_flags: <defaults>
</compile_context>

<pallas_src>
import math

import jax
import jax.numpy as jnp
from jax.experimental import pallas as pl
from jax.experimental.pallas import tpu as pltpu

STATE_DIM = 16
ACTION_DIM = 8
HIDDEN_SIZES = (64, 64)
BATCH = 2


def _cdiv(a, b):
    return (a + b - 1) // b


def _round_up(n, m):
    return ((n + m - 1) // m) * m


def _mlp_means_kernel(x_ref, w1_ref, b1_ref, w2_ref, b2_ref, w3_ref, b3_ref,
                      means_ref):
    """One batch tile, transposed (batch-on-lanes) layout.

    x_ref:     (S,  TB)   batch on the lane axis -> lane-dense activations
    w*_ref:    (out, in)  native PyTorch Linear layout, VMEM-resident
    b*_ref:    (out, 1)
    means_ref: (A,  TB)
    """
    dt = w1_ref.dtype  # compute/activation dtype (f32 or bf16); accumulate f32
    x = x_ref[...]
    h = jnp.tanh(
        jnp.dot(w1_ref[...], x, preferred_element_type=jnp.float32)
        + b1_ref[...].astype(jnp.float32)).astype(dt)              # (H1, TB)
    h = jnp.tanh(
        jnp.dot(w2_ref[...], h, preferred_element_type=jnp.float32)
        + b2_ref[...].astype(jnp.float32)).astype(dt)              # (H2, TB)
    means = (jnp.dot(w3_ref[...], h, preferred_element_type=jnp.float32)
             + b3_ref[...].astype(jnp.float32))                    # (A, TB)
    means_ref[...] = means.astype(means_ref.dtype)


def cts_policy_means_t(x_t, params, *, block_batch=2048):
    """Core Pallas call in transposed layout.

    x_t: (state_dim, B) -- batch on the trailing (lane) axis.
    Returns means_t: (action_dim, B) float32.

    Throughput-critical callers should use this entry point directly (keep the
    batch on the trailing axis end-to-end) so no wrapper transposes are needed.
    """
    S, B = x_t.shape
    A = params["w3"].shape[0]
    pdt = params["w1"].dtype
    x_t = x_t.astype(pdt)

    if B <= 128:
        # Tiny batch: single full-extent block (lane dim == full array dim).
        tb = B
    else:
        # Lane-dense tiles (multiple of 128), capped at block_batch, and at
        # least 2 grid steps so v7x's two TensorCores both get batch work.
        cap = max(128, (block_batch // 128) * 128)
        tb = min(cap, _round_up(_cdiv(B, 2), 128))
    # Ragged last block is masked by Pallas -> no jnp.pad HBM copy of x.
    grid = (_cdiv(B, tb),)

    def resident(arr):
        # Same block every grid step -> weights/biases stay VMEM-resident and
        # are DMA'd from HBM once.
        return pl.BlockSpec(arr.shape, lambda i: (0, 0))

    in_specs = [
        pl.BlockSpec((S, tb), lambda i: (0, i)),   # x_t: tiled along batch (lanes)
        resident(params["w1"]), resident(params["b1"]),
        resident(params["w2"]), resident(params["b2"]),
        resident(params["w3"]), resident(params["b3"]),
    ]
    out_spec = pl.BlockSpec((A, tb), lambda i: (0, i))

    means_t = pl.pallas_call(
        _mlp_means_kernel,
        out_shape=jax.ShapeDtypeStruct((A, B), jnp.float32),
        grid=grid,
        in_specs=in_specs,
        out_specs=out_spec,
        compiler_params=pltpu.CompilerParams(
            dimension_semantics=("parallel",)),   # batch split over v7x's 2 TCs
    )(x_t, params["w1"], params["b1"], params["w2"], params["b2"],
      params["w3"], params["b3"])
    return means_t


def cts_policy_forward(x, params, *, block_batch=2048):
    """x: (B, state_dim). Returns (means, std, log_std), each (B, action_dim) f32.

    Matches CtsPolicy.forward (time_in_state=False, share_weights=False).
    The two small XLA transposes below only preserve the original batch-major
    interface; large-batch callers should call cts_policy_means_t directly.
    """
    means = cts_policy_means_t(x.T, params, block_batch=block_batch).T  # (B, A)
    # std / log_std depend only on the log_stdev parameter -> computed here
    # instead of paying extra narrow in-kernel output stores.
    log_std = jnp.broadcast_to(params["log_stdev"].astype(jnp.float32),
                               means.shape)
    std = jnp.exp(log_std)
    return means, std, log_std


def _xavier_uniform(key, out_features, in_features, dtype):
    # Deterministic xavier-uniform (matches nn.init.xavier_uniform_ on a
    # PyTorch (out, in) Linear weight).
    limit = math.sqrt(6.0 / (in_features + out_features))
    return jax.random.uniform(key, (out_features, in_features), jnp.float32,
                              minval=-limit, maxval=limit).astype(dtype)


def init_params(key, state_dim=STATE_DIM, action_dim=ACTION_DIM,
                hidden_sizes=HIDDEN_SIZES, dtype=jnp.float32):
    # 'xavier' init in the reference: 2-D weights xavier-uniform, biases zero.
    # Weights kept in PyTorch (out, in) layout; biases as (out, 1) for the
    # transposed kernel.  Use dtype=jnp.bfloat16 on v6e/v7x to halve HBM
    # streaming traffic (loosen the allclose tolerance in that config).
    k1, k2, k3 = jax.random.split(key, 3)
    h1, h2 = hidden_sizes
    return {
        "w1": _xavier_uniform(k1, h1, state_dim, dtype),
        "b1": jnp.zeros((h1, 1), dtype),
        "w2": _xavier_uniform(k2, h2, h1, dtype),
        "b2": jnp.zeros((h2, 1), dtype),
        "w3": _xavier_uniform(k3, action_dim, h2, dtype),
        "b3": jnp.zeros((action_dim, 1), dtype),
        "log_stdev": jnp.zeros((1, action_dim), jnp.float32),  # stdev_init = 0
    }


def reference_forward(x, params):
    f32 = jnp.float32
    h = jnp.tanh(x.astype(f32) @ params["w1"].astype(f32).T
                 + params["b1"].astype(f32)[:, 0])
    h = jnp.tanh(h @ params["w2"].astype(f32).T
                 + params["b2"].astype(f32)[:, 0])
    means = h @ params["w3"].astype(f32).T + params["b3"].astype(f32)[:, 0]
    log_std = jnp.broadcast_to(params["log_stdev"].astype(f32), means.shape)
    return means, jnp.exp(log_std), log_std


if __name__ == "__main__":
    key = jax.random.PRNGKey(0)
    kx, kx2, kp = jax.random.split(key, 3)
    params = init_params(kp)

    # Small demo batch (module-consistent shape): B=2, state_dim=16.
    x = jax.random.normal(kx, (BATCH, STATE_DIM), jnp.float32)
    means, std, log_std = jax.block_until_ready(cts_policy_forward(x, params))
    r_means, r_std, r_log_std = reference_forward(x, params)
    assert means.shape == (BATCH, ACTION_DIM)
    assert std.shape == (BATCH, ACTION_DIM)
    assert log_std.shape == (BATCH, ACTION_DIM)
    assert jnp.allclose(means, r_means, atol=1e-5)
    assert jnp.allclose(std, r_std, atol=1e-5)
    assert jnp.allclose(log_std, r_log_std, atol=1e-5)

    # Also exercise the gridded path: >=2 grid steps + ragged last block
    # (no pad copy), still small.
    xb = jax.random.normal(kx2, (260, STATE_DIM), jnp.float32)
    means_b, std_b, log_std_b = jax.block_until_ready(
        cts_policy_forward(xb, params, block_batch=2048))
    rb_means, rb_std, rb_log_std = reference_forward(xb, params)
    assert means_b.shape == (260, ACTION_DIM)
    assert jnp.allclose(means_b, rb_means, atol=1e-5)
    assert jnp.allclose(std_b, rb_std, atol=1e-5)
    assert jnp.allclose(log_std_b, rb_log_std, atol=1e-5)

    print("KERNEL_OK")
</pallas_src>

<mosaic_0001>
module attributes {stable_mosaic.version = 11 : i64} {
  func.func @_mlp_means_kernel(%arg0: i32, %arg1: memref<16x2xf32, #tpu.memory_space<vmem>>, %arg2: memref<64x16xf32, #tpu.memory_space<vmem>>, %arg3: memref<64x1xf32, #tpu.memory_space<vmem>>, %arg4: memref<64x64xf32, #tpu.memory_space<vmem>>, %arg5: memref<64x1xf32, #tpu.memory_space<vmem>>, %arg6: memref<8x64xf32, #tpu.memory_space<vmem>>, %arg7: memref<8x1xf32, #tpu.memory_space<vmem>>, %arg8: memref<8x2xf32, #tpu.memory_space<vmem>>) attributes {dimension_semantics = [#tpu.dimension_semantics<parallel>], iteration_bounds = array<i64: 1>, scalar_prefetch = 0 : i64, scratch_operands = 0 : i64, tpu.core_type = #tpu.core_type<tc>, window_params = [{transform_indices = @transform_0, window_bounds = array<i64: 16, 2>}, {pipeline_mode = #tpu.pipeline_mode<synchronous>, transform_indices = @transform_1, window_bounds = array<i64: 64, 16>}, {pipeline_mode = #tpu.pipeline_mode<synchronous>, transform_indices = @transform_2, window_bounds = array<i64: 64, 1>}, {pipeline_mode = #tpu.pipeline_mode<synchronous>, transform_indices = @transform_3, window_bounds = array<i64: 64, 64>}, {pipeline_mode = #tpu.pipeline_mode<synchronous>, transform_indices = @transform_4, window_bounds = array<i64: 64, 1>}, {pipeline_mode = #tpu.pipeline_mode<synchronous>, transform_indices = @transform_5, window_bounds = array<i64: 8, 64>}, {pipeline_mode = #tpu.pipeline_mode<synchronous>, transform_indices = @transform_6, window_bounds = array<i64: 8, 1>}, {transform_indices = @transform_7, window_bounds = array<i64: 8, 2>}]} {
    %c0 = arith.constant 0 : index
    %c0_0 = arith.constant 0 : index
    %0 = vector.load %arg1[%c0, %c0_0] : memref<16x2xf32, #tpu.memory_space<vmem>>, vector<16x2xf32>
    %c0_1 = arith.constant 0 : index
    %c0_2 = arith.constant 0 : index
    %1 = vector.load %arg2[%c0_1, %c0_2] : memref<64x16xf32, #tpu.memory_space<vmem>>, vector<64x16xf32>
    %cst = arith.constant dense<0.000000e+00> : vector<64x2xf32>
    %2 = tpu.matmul %1, %0, %cst {dimension_numbers = #tpu.dot_dimension_numbers<[1], [0], [0], [1], [0, 0, 1, 1], [], []>} : vector<64x16xf32>, vector<16x2xf32>, vector<64x2xf32> -> vector<64x2xf32>
    %c0_3 = arith.constant 0 : index
    %c0_4 = arith.constant 0 : index
    %3 = vector.load %arg3[%c0_3, %c0_4] : memref<64x1xf32, #tpu.memory_space<vmem>>, vector<64x1xf32>
    %4 = vector.broadcast %3 : vector<64x1xf32> to vector<64x2xf32>
    %5 = arith.addf %2, %4 : vector<64x2xf32>
    %6 = math.tanh %5 : vector<64x2xf32>
    %c0_5 = arith.constant 0 : index
    %c0_6 = arith.constant 0 : index
    %7 = vector.load %arg4[%c0_5, %c0_6] : memref<64x64xf32, #tpu.memory_space<vmem>>, vector<64x64xf32>
    %cst_7 = arith.constant dense<0.000000e+00> : vector<64x2xf32>
    %8 = tpu.matmul %7, %6, %cst_7 {dimension_numbers = #tpu.dot_dimension_numbers<[1], [0], [0], [1], [0, 0, 1, 1], [], []>} : vector<64x64xf32>, vector<64x2xf32>, vector<64x2xf32> -> vector<64x2xf32>
    %c0_8 = arith.constant 0 : index
    %c0_9 = arith.constant 0 : index
    %9 = vector.load %arg5[%c0_8, %c0_9] : memref<64x1xf32, #tpu.memory_space<vmem>>, vector<64x1xf32>
    %10 = vector.broadcast %9 : vector<64x1xf32> to vector<64x2xf32>
    %11 = arith.addf %8, %10 : vector<64x2xf32>
    %12 = math.tanh %11 : vector<64x2xf32>
    %c0_10 = arith.constant 0 : index
    %c0_11 = arith.constant 0 : index
    %13 = vector.load %arg6[%c0_10, %c0_11] : memref<8x64xf32, #tpu.memory_space<vmem>>, vector<8x64xf32>
    %cst_12 = arith.constant dense<0.000000e+00> : vector<8x2xf32>
    %14 = tpu.matmul %13, %12, %cst_12 {dimension_numbers = #tpu.dot_dimension_numbers<[1], [0], [0], [1], [0, 0, 1, 1], [], []>} : vector<8x64xf32>, vector<64x2xf32>, vector<8x2xf32> -> vector<8x2xf32>
    %c0_13 = arith.constant 0 : index
    %c0_14 = arith.constant 0 : index
    %15 = vector.load %arg7[%c0_13, %c0_14] : memref<8x1xf32, #tpu.memory_space<vmem>>, vector<8x1xf32>
    %16 = vector.broadcast %15 : vector<8x1xf32> to vector<8x2xf32>
    %17 = arith.addf %14, %16 : vector<8x2xf32>
    %c0_15 = arith.constant 0 : index
    %c0_16 = arith.constant 0 : index
    %18 = vector.load %arg8[%c0_15, %c0_16] : memref<8x2xf32, #tpu.memory_space<vmem>>, vector<8x2xf32>
    tpu.vector_store %arg8[%c0_15, %c0_16], %17 {strides = array<i32>} : memref<8x2xf32, #tpu.memory_space<vmem>>, vector<8x2xf32>,
    return
  }
  func.func @transform_0(%arg0: i32) -> (i32, i32) {
    %c0_i32 = arith.constant 0 : i32
    %c0_i32_0 = arith.constant 0 : i32
    return %c0_i32, %arg0 : i32, i32
  }
  func.func @transform_1(%arg0: i32) -> (i32, i32) {
    %c0_i32 = arith.constant 0 : i32
    %c0_i32_0 = arith.constant 0 : i32
    %c0_i32_1 = arith.constant 0 : i32
    return %c0_i32, %c0_i32_0 : i32, i32
  }
  func.func @transform_2(%arg0: i32) -> (i32, i32) {
    %c0_i32 = arith.constant 0 : i32
    %c0_i32_0 = arith.constant 0 : i32
    %c0_i32_1 = arith.constant 0 : i32
    return %c0_i32, %c0_i32_0 : i32, i32
  }
  func.func @transform_3(%arg0: i32) -> (i32, i32) {
    %c0_i32 = arith.constant 0 : i32
    %c0_i32_0 = arith.constant 0 : i32
    %c0_i32_1 = arith.constant 0 : i32
    return %c0_i32, %c0_i32_0 : i32, i32
  }
  func.func @transform_4(%arg0: i32) -> (i32, i32) {
    %c0_i32 = arith.constant 0 : i32
    %c0_i32_0 = arith.constant 0 : i32
    %c0_i32_1 = arith.constant 0 : i32
    return %c0_i32, %c0_i32_0 : i32, i32
  }
  func.func @transform_5(%arg0: i32) -> (i32, i32) {
    %c0_i32 = arith.constant 0 : i32
    %c0_i32_0 = arith.constant 0 : i32
    %c0_i32_1 = arith.constant 0 : i32
    return %c0_i32, %c0_i32_0 : i32, i32
  }
  func.func @transform_6(%arg0: i32) -> (i32, i32) {
    %c0_i32 = arith.constant 0 : i32
    %c0_i32_0 = arith.constant 0 : i32
    %c0_i32_1 = arith.constant 0 : i32
    return %c0_i32, %c0_i32_0 : i32, i32
  }
  func.func @transform_7(%arg0: i32) -> (i32, i32) {
    %c0_i32 = arith.constant 0 : i32
    %c0_i32_0 = arith.constant 0 : i32
    return %c0_i32, %arg0 : i32, i32
  }
}

</mosaic_0001>

<llo_original>
// kernel: tpu_custom_call.1
$region0: #{tpu_custom_call.1}
  #allocation0 [shape = 'u32[]', space=smem, size = 0x4, offset = 0x4, fixed_abs, tag = 'smem constant byte address 0x4 - core index']
  #allocation1 [shape = 'u32[72,128]{1,0:T(1,128)}', space=vmem, size = 0x9000, scoped, tag = 'internal scratch']
  %s0 = inlined_call_operand.vmem [shape: f32[16,2], index: 0, kind: input, shape index: {}]
  %s1 = inlined_call_operand.vmem [shape: f32[64,16], index: 1, kind: input, shape index: {}]
  %s2 = inlined_call_operand.vmem [shape: f32[64,1], index: 2, kind: input, shape index: {}]
  %s3 = inlined_call_operand.vmem [shape: f32[64,64], index: 3, kind: input, shape index: {}]
  %s4 = inlined_call_operand.vmem [shape: f32[64,1], index: 4, kind: input, shape index: {}]
  %s5 = inlined_call_operand.vmem [shape: f32[8,64], index: 5, kind: input, shape index: {}]
  %s6 = inlined_call_operand.vmem [shape: f32[8,1], index: 6, kind: input, shape index: {}]
  %s7 = inlined_call_operand.vmem [shape: f32[8,2], index: 7, kind: output, shape index: {}]
  %s8 = sld [smem:[#allocation0]]
  $region38: #{tpu_custom_call.1} parent=0
    _
  %s10 = ssub.s32 1, %s8
  %s11 = scalar_select 0, %s10, %s8
  // Predicated region
  $region2: #{tpu_custom_call.1} parent=0 // pred_check
    _
  $region3: #{tpu_custom_call.1} parent=0 // pred_check_branch
    %13 = sbr.rel (0) target = $region5
  $region4: #{tpu_custom_call.1} parent=0 // pred_region
    _
  $region5: #{tpu_custom_call.1} parent=0 // pred_fallthru
    _
  // Predicated region
  $region6: #{tpu_custom_call.1} parent=0 // pred_check
    _
  $region7: #{tpu_custom_call.1} parent=0 // pred_check_branch
    %15 = sbr.rel (0) target = $region9
  $region8: #{tpu_custom_call.1} parent=0 // pred_region
    _
  $region9: #{tpu_custom_call.1} parent=0 // pred_fallthru
    _
  // Predicated region
  $region10: #{tpu_custom_call.1} parent=0 // pred_check
    _
  $region11: #{tpu_custom_call.1} parent=0 // pred_check_branch
    %17 = sbr.rel (0) target = $region13
  $region12: #{tpu_custom_call.1} parent=0 // pred_region
    _
  $region13: #{tpu_custom_call.1} parent=0 // pred_fallthru
    _
  // Predicated region
  $region14: #{tpu_custom_call.1} parent=0 // pred_check
    _
  $region15: #{tpu_custom_call.1} parent=0 // pred_check_branch
    %19 = sbr.rel (0) target = $region17
  $region16: #{tpu_custom_call.1} parent=0 // pred_region
    _
  $region17: #{tpu_custom_call.1} parent=0 // pred_fallthru
    _
  // Predicated region
  $region18: #{tpu_custom_call.1} parent=0 // pred_check
    _
  $region19: #{tpu_custom_call.1} parent=0 // pred_check_branch
    %21 = sbr.rel (0) target = $region21
  $region20: #{tpu_custom_call.1} parent=0 // pred_region
    _
  $region21: #{tpu_custom_call.1} parent=0 // pred_fallthru
    _
  // Predicated region
  $region22: #{tpu_custom_call.1} parent=0 // pred_check
    _
  $region23: #{tpu_custom_call.1} parent=0 // pred_check_branch
    %23 = sbr.rel (0) target = $region25
  $region24: #{tpu_custom_call.1} parent=0 // pred_region
    _
  $region25: #{tpu_custom_call.1} parent=0 // pred_fallthru
    _
  // Predicated region
  $region26: #{tpu_custom_call.1} parent=0 // pred_check
    _
  $region27: #{tpu_custom_call.1} parent=0 // pred_check_branch
    %25 = sbr.rel (0) target = $region29
  $region28: #{tpu_custom_call.1} parent=0 // pred_region
    _
  $region29: #{tpu_custom_call.1} parent=0 // pred_fallthru
    _
  %v26 = vld [vmem:[%s0] sm:$0xff]
  %v27 = vld [vmem:[%s0 + $0x8] sm:$0xff]
  %v28 = vld [vmem:[%s1] sm:$0xff]
  %v29 = vld [vmem:[%s1 + $0x8] sm:$0xff]
  %v30 = vld [vmem:[%s1 + $0x10] sm:$0xff]
  %v31 = vld [vmem:[%s1 + $0x18] sm:$0xff]
  %v32 = vld [vmem:[%s1 + $0x20] sm:$0xff]
  %v33 = vld [vmem:[%s1 + $0x28] sm:$0xff]
  %v34 = vld [vmem:[%s1 + $0x30] sm:$0xff]
  %v35 = vld [vmem:[%s1 + $0x38] sm:$0xff]
  %v36 = vld [vmem:[%s2] sm:$0xff]
  %v37 = vld [vmem:[%s2 + $0x8] sm:$0xff]
  %v38 = vld [vmem:[%s2 + $0x10] sm:$0xff]
  %v39 = vld [vmem:[%s2 + $0x18] sm:$0xff]
  %v40 = vld [vmem:[%s2 + $0x20] sm:$0xff]
  %v41 = vld [vmem:[%s2 + $0x28] sm:$0xff]
  %v42 = vld [vmem:[%s2 + $0x30] sm:$0xff]
  %v43 = vld [vmem:[%s2 + $0x38] sm:$0xff]
  %45 = vset.pattern.permute.xlu0 0
  %46 = vperm.xlu0 %45, %v36
  %v47 = vpop.permute.xlu0 %46
  %50 = vset.pattern.permute.xlu0 0
  %51 = vperm.xlu0 %50, %v37
  %v52 = vpop.permute.xlu0 %51
  %55 = vset.pattern.permute.xlu0 0
  %56 = vperm.xlu0 %55, %v38
  %v57 = vpop.permute.xlu0 %56
  %60 = vset.pattern.permute.xlu0 0
  %61 = vperm.xlu0 %60, %v39
  %v62 = vpop.permute.xlu0 %61
  %65 = vset.pattern.permute.xlu0 0
  %66 = vperm.xlu0 %65, %v40
  %v67 = vpop.permute.xlu0 %66
  %70 = vset.pattern.permute.xlu0 0
  %71 = vperm.xlu0 %70, %v41
  %v72 = vpop.permute.xlu0 %71
  %75 = vset.pattern.permute.xlu0 0
  %76 = vperm.xlu0 %75, %v42
  %v77 = vpop.permute.xlu0 %76
  %80 = vset.pattern.permute.xlu0 0
  %81 = vperm.xlu0 %80, %v43
  %v82 = vpop.permute.xlu0 %81
  %vm84 = vcmask 130048
  %v86 = vsel %vm84, %v28, 0
  %v89 = vsel %vm84, %v29, 0
  %v92 = vsel %vm84, %v30, 0
  %v95 = vsel %vm84, %v31, 0
  %v98 = vsel %vm84, %v32, 0
  %v101 = vsel %vm84, %v33, 0
  %v104 = vsel %vm84, %v34, 0
  %v107 = vsel %vm84, %v35, 0
  %109 = vmatpush.msra.mxu0 0.0
  %110 = vmatpush.msra.mxu0 0.0
  %111 = vmatpush.msra.mxu0 0.0
  %112 = vmatpush.msra.mxu0 0.0
  %113 = vmatpush.msra.mxu0 0.0
  %114 = vmatpush.msra.mxu0 0.0
  %115 = vmatpush.msra.mxu0 0.0
  %116 = vmatpush.msra.mxu0 0.0
  %117 = vmatpush.msra.mxu0 0.0
  %118 = vmatpush.msra.mxu0 0.0
  %119 = vmatpush.msra.mxu0 0.0
  %120 = vmatpush.msra.mxu0 0.0
  %121 = vmatpush.msra.mxu0 0.0
  %122 = vmatpush.msra.mxu0 0.0
  %123 = vmatpush.msra.mxu0 %v27
  %124 = vmatpush.msra.mxu0 %v26
  %125 = vmatmul.f32.gmra.mxu0 %v86
  %v126 = vpop.f32.mrf.mxu0
  %v127 = vadd.f32 %v47, %v126
  %128 = vmatmul.f32.gmra.mxu0 %v89
  %v129 = vpop.f32.mrf.mxu0
  %v130 = vadd.f32 %v52, %v129
  %131 = vmatmul.f32.gmra.mxu0 %v92
  %v132 = vpop.f32.mrf.mxu0
  %v133 = vadd.f32 %v57, %v132
  %134 = vmatmul.f32.gmra.mxu0 %v95
  %v135 = vpop.f32.mrf.mxu0
  %v136 = vadd.f32 %v62, %v135
  %137 = vmatmul.f32.gmra.mxu0 %v98
  %v138 = vpop.f32.mrf.mxu0
  %v139 = vadd.f32 %v67, %v138
  %140 = vmatmul.f32.gmra.mxu0 %v101
  %v141 = vpop.f32.mrf.mxu0
  %v142 = vadd.f32 %v72, %v141
  %143 = vmatmul.f32.gmra.mxu0 %v104
  %v144 = vpop.f32.mrf.mxu0
  %v145 = vadd.f32 %v77, %v144
  %146 = vmatmul.f32.gmra.mxu0 %v107
  %v147 = vpop.f32.mrf.mxu0
  %v148 = vadd.f32 %v82, %v147
  %149 = vdwg.mxu0
  %v150 = vtanh.pop %v127
  %v151 = vtanh.pop %v130
  %v152 = vtanh.pop %v133
  %v153 = vtanh.pop %v136
  %v154 = vtanh.pop %v139
  %v155 = vtanh.pop %v142
  %v156 = vtanh.pop %v145
  %v157 = vtanh.pop %v148
  %v158 = vld [vmem:[%s3] sm:$0xff]
  %v159 = vld [vmem:[%s3 + $0x8] sm:$0xff]
  %v160 = vld [vmem:[%s3 + $0x10] sm:$0xff]
  %v161 = vld [vmem:[%s3 + $0x18] sm:$0xff]
  %v162 = vld [vmem:[%s3 + $0x20] sm:$0xff]
  %v163 = vld [vmem:[%s3 + $0x28] sm:$0xff]
  %v164 = vld [vmem:[%s3 + $0x30] sm:$0xff]
  %v165 = vld [vmem:[%s3 + $0x38] sm:$0xff]
  %v166 = vld [vmem:[%s4] sm:$0xff]
  %v167 = vld [vmem:[%s4 + $0x8] sm:$0xff]
  %v168 = vld [vmem:[%s4 + $0x10] sm:$0xff]
  %v169 = vld [vmem:[%s4 + $0x18] sm:$0xff]
  %v170 = vld [vmem:[%s4 + $0x20] sm:$0xff]
  %v171 = vld [vmem:[%s4 + $0x28] sm:$0xff]
  %v172 = vld [vmem:[%s4 + $0x30] sm:$0xff]
  %v173 = vld [vmem:[%s4 + $0x38] sm:$0xff]
  %175 = vset.pattern.permute.xlu0 0
  %176 = vperm.xlu0 %175, %v166
  %v177 = vpop.permute.xlu0 %176
  %180 = vset.pattern.permute.xlu0 0
  %181 = vperm.xlu0 %180, %v167
  %v182 = vpop.permute.xlu0 %181
  %185 = vset.pattern.permute.xlu0 0
  %186 = vperm.xlu0 %185, %v168
  %v187 = vpop.permute.xlu0 %186
  %190 = vset.pattern.permute.xlu0 0
  %191 = vperm.xlu0 %190, %v169
  %v192 = vpop.permute.xlu0 %191
  %195 = vset.pattern.permute.xlu0 0
  %196 = vperm.xlu0 %195, %v170
  %v197 = vpop.permute.xlu0 %196
  %200 = vset.pattern.permute.xlu0 0
  %201 = vperm.xlu0 %200, %v171
  %v202 = vpop.permute.xlu0 %201
  %205 = vset.pattern.permute.xlu0 0
  %206 = vperm.xlu0 %205, %v172
  %v207 = vpop.permute.xlu0 %206
  %210 = vset.pattern.permute.xlu0 0
  %211 = vperm.xlu0 %210, %v173
  %v212 = vpop.permute.xlu0 %211
  %vm214 = vcmask 523264
  %v216 = vsel %vm214, %v158, 0
  %v219 = vsel %vm214, %v159, 0
  %v222 = vsel %vm214, %v160, 0
  %v225 = vsel %vm214, %v161, 0
  %v228 = vsel %vm214, %v162, 0
  %v231 = vsel %vm214, %v163, 0
  %v234 = vsel %vm214, %v164, 0
  %v237 = vsel %vm214, %v165, 0
  %239 = vmatpush.msra.mxu0 0.0
  %240 = vmatpush.msra.mxu0 0.0
  %241 = vmatpush.msra.mxu0 0.0
  %242 = vmatpush.msra.mxu0 0.0
  %243 = vmatpush.msra.mxu0 0.0
  %244 = vmatpush.msra.mxu0 0.0
  %245 = vmatpush.msra.mxu0 0.0
  %246 = vmatpush.msra.mxu0 0.0
  %247 = vmatpush.msra.mxu0 %v157
  %248 = vmatpush.msra.mxu0 %v156
  %249 = vmatpush.msra.mxu0 %v155
  %250 = vmatpush.msra.mxu0 %v154
  %251 = vmatpush.msra.mxu0 %v153
  %252 = vmatpush.msra.mxu0 %v152
  %253 = vmatpush.msra.mxu0 %v151
  %254 = vmatpush.msra.mxu0 %v150
  %255 = vmatmul.f32.gmra.mxu0 %v216
  %v256 = vpop.f32.mrf.mxu0
  %v257 = vadd.f32 %v177, %v256
  %258 = vmatmul.f32.gmra.mxu0 %v219
  %v259 = vpop.f32.mrf.mxu0
  %v260 = vadd.f32 %v182, %v259
  %261 = vmatmul.f32.gmra.mxu0 %v222
  %v262 = vpop.f32.mrf.mxu0
  %v263 = vadd.f32 %v187, %v262
  %264 = vmatmul.f32.gmra.mxu0 %v225
  %v265 = vpop.f32.mrf.mxu0
  %v266 = vadd.f32 %v192, %v265
  %267 = vmatmul.f32.gmra.mxu0 %v228
  %v268 = vpop.f32.mrf.mxu0
  %v269 = vadd.f32 %v197, %v268
  %270 = vmatmul.f32.gmra.mxu0 %v231
  %v271 = vpop.f32.mrf.mxu0
  %v272 = vadd.f32 %v202, %v271
  %273 = vmatmul.f32.gmra.mxu0 %v234
  %v274 = vpop.f32.mrf.mxu0
  %v275 = vadd.f32 %v207, %v274
  %276 = vmatmul.f32.gmra.mxu0 %v237
  %v277 = vpop.f32.mrf.mxu0
  %v278 = vadd.f32 %v212, %v277
  %279 = vdwg.mxu0
  %v280 = vtanh.pop %v257
  %v281 = vtanh.pop %v260
  %v282 = vtanh.pop %v263
  %v283 = vtanh.pop %v266
  %v284 = vtanh.pop %v269
  %v285 = vtanh.pop %v272
  %v286 = vtanh.pop %v275
  %v287 = vtanh.pop %v278
  %v288 = vld [vmem:[%s5] sm:$0xff]
  %v289 = vld [vmem:[%s6] sm:$0xff]
  %291 = vset.pattern.permute.xlu0 0
  %292 = vperm.xlu0 %291, %v289
  %v293 = vpop.permute.xlu0 %292
  %v296 = vsel %vm214, %v288, 0
  %298 = vmatpush.msra.mxu0 0.0
  %299 = vmatpush.msra.mxu0 0.0
  %300 = vmatpush.msra.mxu0 0.0
  %301 = vmatpush.msra.mxu0 0.0
  %302 = vmatpush.msra.mxu0 0.0
  %303 = vmatpush.msra.mxu0 0.0
  %304 = vmatpush.msra.mxu0 0.0
  %305 = vmatpush.msra.mxu0 0.0
  %306 = vmatpush.msra.mxu0 %v287
  %307 = vmatpush.msra.mxu0 %v286
  %308 = vmatpush.msra.mxu0 %v285
  %309 = vmatpush.msra.mxu0 %v284
  %310 = vmatpush.msra.mxu0 %v283
  %311 = vmatpush.msra.mxu0 %v282
  %312 = vmatpush.msra.mxu0 %v281
  %313 = vmatpush.msra.mxu0 %v280
  %314 = vmatmul.f32.gmra.mxu0 %v296
  %v315 = vpop.f32.mrf.mxu0
  %v316 = vadd.f32 %v293, %v315
  %317 = vdwg.mxu0
  %vm318 = vcmask 15360
  %319 = vst.msk [vmem:[%s7] sm:$0xff] %vm318, %v316
  // Predicated region
  $region30: #{tpu_custom_call.1} parent=0 // pred_check
    _
  $region31: #{tpu_custom_call.1} parent=0 // pred_check_branch
    %321 = sbr.rel (0) target = $region33
  $region32: #{tpu_custom_call.1} parent=0 // pred_region
    _
  $region33: #{tpu_custom_call.1} parent=0 // pred_fallthru
    _
  // Predicated region
  $region34: #{tpu_custom_call.1} parent=0 // pred_check
    _
  $region35: #{tpu_custom_call.1} parent=0 // pred_check_branch
    %323 = sbr.rel (0) target = $region37
  $region36: #{tpu_custom_call.1} parent=0 // pred_region
    _
  $region37: #{tpu_custom_call.1} parent=0 // pred_fallthru
    _

</llo_original>
